<compile_context>
chip_gen: v7x
topology: tpu7x:2x2x1
jax: 0.10.0
libtpu: 0.0.40
codegen_flags: <defaults>
</compile_context>

<pallas_src>
import functools
import math

import jax
import jax.numpy as jnp
from jax.experimental import pallas as pl
from jax.experimental.pallas import tpu as pltpu


def _round_up(x, m):
    return (x + m - 1) // m * m


def _vmem_capacity_bytes():
    """Best-effort physical-VMEM query; falls back to the v7x floor (64 MiB)."""
    try:
        info = pltpu.get_tpu_info()
        cap = getattr(info, "vmem_capacity_bytes", None)
        if cap:
            return int(cap)
    except Exception:
        pass
    return 64 * 1024 * 1024


def _mlm_head_kernel(x_ref, w_ref, b_ref, g_ref, beta_ref, wd_ref, bd_ref,
                     o_ref, t_ref, *, eps, approximate_gelu):
    """One (row-tile, vocab-tile) grid step.

    x_ref   : (TM, H)  input rows (native dtype, cast to compute dtype in-kernel)
    w_ref   : (H, H)   dense weight, in x out    (compute dtype, e.g. bf16)
    b_ref   : (1, H)   dense bias                (f32)
    g_ref   : (1, H)   LayerNorm gamma           (f32)
    beta_ref: (1, H)   LayerNorm beta            (f32)
    wd_ref  : (H, TV)  decoder weight tile       (compute dtype)
    bd_ref  : (1, TV)  decoder bias tile         (f32)
    o_ref   : (TM, TV) logits tile               (out dtype, default bf16)
    t_ref   : (TM, H)  VMEM scratch holding the transformed activations
    """
    vj = pl.program_id(1)

    # The transform depends only on the row tile -> compute it once per row tile
    # (innermost vocab axis step 0) and keep it resident in VMEM scratch.
    @pl.when(vj == 0)
    def _():
        # dense: x @ W + b  (bf16 operands, f32 accumulation on the MXU)
        xc = x_ref[...].astype(w_ref.dtype)
        h = jnp.dot(xc, w_ref[...],
                    preferred_element_type=jnp.float32) + b_ref[...]
        if approximate_gelu:
            # tanh-approx GELU: runs on the EUP (separate VLIW slot), frees the VALU.
            h = jax.nn.gelu(h, approximate=True)
        else:
            # exact erf-based GELU (matches HF/torch 'gelu' bit-for-bit semantics)
            h = 0.5 * h * (1.0 + jax.lax.erf(h * (1.0 / math.sqrt(2.0))))
        # LayerNorm over the hidden axis in f32.
        # NOTE: zero-padded rows hit var=0 -> rsqrt(eps) ~ 1e6, but it multiplies
        # c=0 so no NaN/Inf escapes; padded rows are sliced off in the wrapper.
        mean = jnp.mean(h, axis=-1, keepdims=True)
        c = h - mean
        var = jnp.mean(c * c, axis=-1, keepdims=True)
        t = c * jax.lax.rsqrt(var + eps) * g_ref[...] + beta_ref[...]
        # Intentional bf16 intermediate before the decoder matmul (documented).
        t_ref[...] = t.astype(t_ref.dtype)

    # Decoder projection for this vocab tile: t @ W_dec[:, tile] + b_dec[tile].
    o_ref[...] = (jnp.dot(t_ref[...], wd_ref[...],
                          preferred_element_type=jnp.float32)
                  + bd_ref[...]).astype(o_ref.dtype)


def prepare_mlm_head_params(dense_w, dense_b, ln_gamma, ln_beta,
                            decoder_w, decoder_b, *,
                            tile_v=1024, compute_dtype=jnp.bfloat16):
    """One-time weight preparation (transpose / cast / pad), hoisted out of the forward.

    dense_w   : [H, H]  torch nn.Linear layout (out x in)
    decoder_w : [V, H]  torch nn.Linear layout (out x in; tied to embeddings)
    Padding of the vocab axis to a multiple of the vocab tile happens here, once.
    """
    H = dense_w.shape[1]
    V = decoder_w.shape[0]
    tv = _round_up(min(tile_v, _round_up(V, 128)), 128)
    v_pad = _round_up(V, tv)

    wd = decoder_w.T.astype(compute_dtype)              # (H, V)
    bd = decoder_b.astype(jnp.float32)
    if v_pad != V:
        wd = jnp.pad(wd, ((0, 0), (0, v_pad - V)))
        bd = jnp.pad(bd, (0, v_pad - V))

    return {
        "w": dense_w.T.astype(compute_dtype),            # (H_in, H_out)
        "b": dense_b.reshape(1, H).astype(jnp.float32),
        "gamma": ln_gamma.reshape(1, H).astype(jnp.float32),
        "beta": ln_beta.reshape(1, H).astype(jnp.float32),
        "wd": wd,                                        # (H, v_pad)
        "bd": bd.reshape(1, v_pad),
        "vocab_size": V,
        "tile_v": tv,
    }


def bert_only_mlm_head_prepared(x, params, *, eps=1e-12, tile_m=1024,
                                out_dtype=jnp.bfloat16, approximate_gelu=True,
                                vmem_limit_bytes=None):
    """Forward pass given prepared params.  x: [B, S, H] -> [B, S, V] logits."""
    B, S, H = x.shape
    N = B * S
    V = params["vocab_size"]
    tv = params["tile_v"]
    v_pad = params["wd"].shape[1]
    compute_dtype = params["wd"].dtype

    xbytes = jnp.dtype(x.dtype).itemsize
    cbytes = jnp.dtype(compute_dtype).itemsize
    obytes = jnp.dtype(out_dtype).itemsize

    # --- row-tile sizing -----------------------------------------------------
    # multiple of 16 (bf16 sublane packing), preferably a multiple of 256 (MXU
    # M-dim on v6e/v7x); keep >= 2 row tiles when the input is big enough so the
    # "parallel" row axis can be sharded across v7x's two TensorCores.
    tm = min(tile_m, _round_up(N, 16))
    if N >= 512:
        tm = min(tm, _round_up(-(-N // 2), 256))
    tm = (tm // 256) * 256 if tm >= 256 else _round_up(tm, 16)

    # --- VMEM budgeting (v7x: 64 MiB/TC; v5e/v6e: 128 MiB) --------------------
    budget = vmem_limit_bytes
    if budget is None:
        budget = int(_vmem_capacity_bytes() * 0.75)   # headroom for compiler scratch

    def footprint(tm_):
        return (2 * tm_ * H * xbytes           # x tile, double-buffered
                + H * H * cbytes               # dense W, single-buffered
                + 3 * H * 4 + 2 * tv * 4       # small f32 vectors
                + 2 * H * tv * cbytes          # decoder W tile, double-buffered
                + 2 * tm_ * tv * obytes        # output tile, double-buffered
                + tm_ * H * cbytes)            # transform scratch

    while footprint(tm) > budget and tm > 256:
        tm = max(256, tm // 2)

    n_pad = _round_up(N, tm)
    grid = (n_pad // tm, v_pad // tv)

    x2 = x.reshape(N, H)
    if n_pad != N:
        x2 = jnp.pad(x2, ((0, n_pad - N), (0, 0)))

    cost = pl.CostEstimate(
        flops=2 * n_pad * H * H + 2 * n_pad * H * v_pad,
        transcendentals=n_pad * H,
        bytes_accessed=(n_pad * H * xbytes                  # x streamed once
                        + H * H * cbytes                    # dense W
                        + grid[0] * H * v_pad * cbytes      # decoder W re-streamed per row tile
                        + n_pad * v_pad * obytes            # logits writeback
                        + (3 * H + v_pad) * 4),
    )

    def _invariant(shape):
        # Grid-invariant operand: constant index_map (fetched once); single-buffered
        # to halve its VMEM footprint (no pipelining benefit for a constant block).
        return pl.BlockSpec(shape, lambda i, j: (0, 0),
                            pipeline_mode=pl.Buffered(1))

    kernel = functools.partial(_mlm_head_kernel, eps=eps,
                               approximate_gelu=approximate_gelu)

    out = pl.pallas_call(
        kernel,
        out_shape=jax.ShapeDtypeStruct((n_pad, v_pad), out_dtype),
        grid_spec=pltpu.PrefetchScalarGridSpec(
            num_scalar_prefetch=0,
            grid=grid,
            in_specs=[
                pl.BlockSpec((tm, H), lambda i, j: (i, 0)),   # x row tile
                _invariant((H, H)),                           # dense W
                _invariant((1, H)),                           # dense b
                _invariant((1, H)),                           # LN gamma
                _invariant((1, H)),                           # LN beta
                pl.BlockSpec((H, tv), lambda i, j: (0, j)),   # decoder W tile
                pl.BlockSpec((1, tv), lambda i, j: (0, j)),   # decoder b tile
            ],
            out_specs=pl.BlockSpec((tm, tv), lambda i, j: (i, j)),
            scratch_shapes=[pltpu.VMEM((tm, H), compute_dtype)],
        ),
        compiler_params=pltpu.CompilerParams(
            dimension_semantics=("parallel", "arbitrary"),
            vmem_limit_bytes=budget,
        ),
        cost_estimate=cost,
    )(x2, params["w"], params["b"], params["gamma"], params["beta"],
      params["wd"], params["bd"])

    return out[:N, :V].reshape(B, S, V)


def bert_only_mlm_head(x, dense_w, dense_b, ln_gamma, ln_beta,
                       decoder_w, decoder_b, *, eps=1e-12,
                       tile_m=1024, tile_v=1024,
                       compute_dtype=jnp.bfloat16, out_dtype=jnp.bfloat16,
                       approximate_gelu=True, vmem_limit_bytes=None):
    """Convenience wrapper: prep + forward in one call.

    For repeated forwards with static weights, call prepare_mlm_head_params once and
    use bert_only_mlm_head_prepared to avoid re-transposing/casting the decoder weight.
    """
    params = prepare_mlm_head_params(dense_w, dense_b, ln_gamma, ln_beta,
                                     decoder_w, decoder_b,
                                     tile_v=tile_v, compute_dtype=compute_dtype)
    return bert_only_mlm_head_prepared(x, params, eps=eps, tile_m=tile_m,
                                       out_dtype=out_dtype,
                                       approximate_gelu=approximate_gelu,
                                       vmem_limit_bytes=vmem_limit_bytes)


if __name__ == "__main__":
    # Small config consistent with the module:
    # batch=2, seq=8, hidden=32, vocab=200, hidden_act='gelu', eps=1e-12.
    B, S, H, V = 2, 8, 32, 200
    eps = 1e-12

    key = jax.random.PRNGKey(0)
    ks = jax.random.split(key, 7)
    x = jax.random.normal(ks[0], (B, S, H), dtype=jnp.float32)
    dense_w = jax.random.normal(ks[1], (H, H), jnp.float32) / math.sqrt(H)
    dense_b = 0.1 * jax.random.normal(ks[2], (H,), jnp.float32)
    ln_gamma = 1.0 + 0.1 * jax.random.normal(ks[3], (H,), jnp.float32)
    ln_beta = 0.1 * jax.random.normal(ks[4], (H,), jnp.float32)
    decoder_w = jax.random.normal(ks[5], (V, H), jnp.float32) / math.sqrt(H)
    decoder_b = 0.1 * jax.random.normal(ks[6], (V,), jnp.float32)

    # One-time weight prep (hoisted out of the forward).  Tiny tile_v here only to
    # exercise the multi-vocab-tile grid + padding paths at toy shapes; production
    # defaults are tile_m=1024, tile_v=1024 (VMEM-budgeted per generation).
    params = prepare_mlm_head_params(dense_w, dense_b, ln_gamma, ln_beta,
                                     decoder_w, decoder_b, tile_v=128)

    # Reference mirroring the kernel's bf16-matmul / f32-everything-else math.
    def ref_bf16(xx, approximate):
        xb = xx.reshape(-1, H).astype(jnp.bfloat16)
        h = jnp.dot(xb, dense_w.T.astype(jnp.bfloat16),
                    preferred_element_type=jnp.float32) + dense_b
        if approximate:
            h = jax.nn.gelu(h, approximate=True)
        else:
            h = 0.5 * h * (1.0 + jax.lax.erf(h / math.sqrt(2.0)))
        mu = h.mean(-1, keepdims=True)
        c = h - mu
        var = (c * c).mean(-1, keepdims=True)
        t = (c * jax.lax.rsqrt(var + eps) * ln_gamma + ln_beta).astype(jnp.bfloat16)
        logits = jnp.dot(t, decoder_w.T.astype(jnp.bfloat16),
                         preferred_element_type=jnp.float32) + decoder_b
        return logits.reshape(B, S, V)

    # Full-f32 reference (the exact PyTorch-module math: erf GELU, f32 throughout).
    def ref_f32(xx):
        hp = jax.lax.Precision.HIGHEST
        h = jnp.dot(xx.reshape(-1, H), dense_w.T, precision=hp) + dense_b
        h = 0.5 * h * (1.0 + jax.lax.erf(h / math.sqrt(2.0)))
        mu = h.mean(-1, keepdims=True)
        c = h - mu
        t = c / jnp.sqrt((c * c).mean(-1, keepdims=True) + eps) * ln_gamma + ln_beta
        return (jnp.dot(t, decoder_w.T, precision=hp) + decoder_b).reshape(B, S, V)

    # --- run 1: perf defaults (tanh-approx GELU, bf16 logits) -----------------
    out_fast = bert_only_mlm_head_prepared(x, params, eps=eps)
    out_fast = jax.block_until_ready(out_fast)
    assert out_fast.shape == (B, S, V)
    assert out_fast.dtype == jnp.bfloat16
    assert jnp.allclose(out_fast.astype(jnp.float32), ref_bf16(x, approximate=True),
                        atol=3e-2, rtol=3e-2), "mismatch vs tanh-gelu bf16 reference"

    # --- run 2: exact-semantics mode (erf GELU, f32 logits) -------------------
    out_exact = bert_only_mlm_head_prepared(x, params, eps=eps,
                                            approximate_gelu=False,
                                            out_dtype=jnp.float32)
    out_exact = jax.block_until_ready(out_exact)
    assert out_exact.shape == (B, S, V)
    assert jnp.allclose(out_exact, ref_bf16(x, approximate=False),
                        atol=5e-3, rtol=5e-3), "mismatch vs erf bf16-compute reference"
    assert jnp.allclose(out_exact, ref_f32(x),
                        atol=1e-1, rtol=1e-1), "mismatch vs f32 reference"

    print("KERNEL_OK")
</pallas_src>

<mosaic_0001>
module attributes {stable_mosaic.version = 11 : i64} {
  func.func @_mlm_head_kernel(%arg0: i32, %arg1: i32, %arg2: memref<16x32xf32, #tpu.memory_space<vmem>>, %arg3: memref<32x32xbf16, #tpu.memory_space<vmem>>, %arg4: memref<1x32xf32, #tpu.memory_space<vmem>>, %arg5: memref<1x32xf32, #tpu.memory_space<vmem>>, %arg6: memref<1x32xf32, #tpu.memory_space<vmem>>, %arg7: memref<32x128xbf16, #tpu.memory_space<vmem>>, %arg8: memref<1x128xf32, #tpu.memory_space<vmem>>, %arg9: memref<16x128xbf16, #tpu.memory_space<vmem>>, %arg10: memref<16x32xbf16, #tpu.memory_space<vmem>>) attributes {dimension_semantics = [#tpu.dimension_semantics<parallel>, #tpu.dimension_semantics<arbitrary>], iteration_bounds = array<i64: 1, 2>, scalar_prefetch = 0 : i64, scratch_operands = 1 : i64, tpu.core_type = #tpu.core_type<tc>, window_params = [{transform_indices = @transform_0, window_bounds = array<i64: 16, 32>}, {pipeline_mode = #tpu.pipeline_mode<synchronous>, transform_indices = @transform_1, window_bounds = array<i64: 32, 32>}, {pipeline_mode = #tpu.pipeline_mode<synchronous>, transform_indices = @transform_2, window_bounds = array<i64: 1, 32>}, {pipeline_mode = #tpu.pipeline_mode<synchronous>, transform_indices = @transform_3, window_bounds = array<i64: 1, 32>}, {pipeline_mode = #tpu.pipeline_mode<synchronous>, transform_indices = @transform_4, window_bounds = array<i64: 1, 32>}, {transform_indices = @transform_5, window_bounds = array<i64: 32, 128>}, {transform_indices = @transform_6, window_bounds = array<i64: 1, 128>}, {transform_indices = @transform_7, window_bounds = array<i64: 16, 128>}]} {
    %c0_i32 = arith.constant 0 : i32
    %0 = arith.cmpi eq, %arg1, %c0_i32 : i32
    %1 = arith.extui %0 : i1 to i32
    %c0_i32_0 = arith.constant 0 : i32
    %2 = arith.cmpi ne, %1, %c0_i32_0 : i32
    scf.if %2 {
      %c0_8 = arith.constant 0 : index
      %c0_9 = arith.constant 0 : index
      %11 = vector.load %arg2[%c0_8, %c0_9] : memref<16x32xf32, #tpu.memory_space<vmem>>, vector<16x32xf32>
      %12 = arith.truncf %11 : vector<16x32xf32> to vector<16x32xbf16>
      %c0_10 = arith.constant 0 : index
      %c0_11 = arith.constant 0 : index
      %13 = vector.load %arg3[%c0_10, %c0_11] : memref<32x32xbf16, #tpu.memory_space<vmem>>, vector<32x32xbf16>
      %cst_12 = arith.constant dense<0.000000e+00> : vector<16x32xf32>
      %14 = tpu.matmul %12, %13, %cst_12 {dimension_numbers = #tpu.dot_dimension_numbers<[1], [0], [0], [1], [0, 0, 1, 1], [], []>} : vector<16x32xbf16>, vector<32x32xbf16>, vector<16x32xf32> -> vector<16x32xf32>
      %c0_13 = arith.constant 0 : index
      %c0_14 = arith.constant 0 : index
      %15 = vector.load %arg4[%c0_13, %c0_14] : memref<1x32xf32, #tpu.memory_space<vmem>>, vector<1x32xf32>
      %16 = vector.broadcast %15 : vector<1x32xf32> to vector<16x32xf32>
      %17 = arith.addf %14, %16 : vector<16x32xf32>
      %18 = arith.mulf %17, %17 : vector<16x32xf32>
      %19 = arith.mulf %17, %18 : vector<16x32xf32>
      %cst_15 = arith.constant 4.471500e-02 : f32
      %20 = vector.broadcast %cst_15 : f32 to vector<16x32xf32>
      %21 = arith.mulf %20, %19 : vector<16x32xf32>
      %22 = arith.addf %17, %21 : vector<16x32xf32>
      %cst_16 = arith.constant 0.797884583 : f32
      %23 = vector.broadcast %cst_16 : f32 to vector<16x32xf32>
      %24 = arith.mulf %23, %22 : vector<16x32xf32>
      %25 = math.tanh %24 : vector<16x32xf32>
      %cst_17 = arith.constant 1.000000e+00 : f32
      %26 = vector.broadcast %cst_17 : f32 to vector<16x32xf32>
      %27 = arith.addf %26, %25 : vector<16x32xf32>
      %cst_18 = arith.constant 5.000000e-01 : f32
      %28 = vector.broadcast %cst_18 : f32 to vector<16x32xf32>
      %29 = arith.mulf %28, %27 : vector<16x32xf32>
      %30 = arith.mulf %17, %29 : vector<16x32xf32>
      %cst_19 = arith.constant dense<0.000000e+00> : vector<16xf32>
      %31 = vector.multi_reduction <add>, %30, %cst_19 [1] : vector<16x32xf32> to vector<16xf32>
      %32 = vector.shape_cast %31 : vector<16xf32> to vector<16x1xf32>
      %cst_20 = arith.constant 3.200000e+01 : f32
      %33 = vector.broadcast %cst_20 : f32 to vector<16x1xf32>
      %34 = arith.divf %32, %33 : vector<16x1xf32>
      %35 = vector.broadcast %34 : vector<16x1xf32> to vector<16x32xf32>
      %36 = arith.subf %30, %35 : vector<16x32xf32>
      %37 = arith.mulf %36, %36 : vector<16x32xf32>
      %cst_21 = arith.constant dense<0.000000e+00> : vector<16xf32>
      %38 = vector.multi_reduction <add>, %37, %cst_21 [1] : vector<16x32xf32> to vector<16xf32>
      %39 = vector.shape_cast %38 : vector<16xf32> to vector<16x1xf32>
      %cst_22 = arith.constant 3.200000e+01 : f32
      %40 = vector.broadcast %cst_22 : f32 to vector<16x1xf32>
      %41 = arith.divf %39, %40 : vector<16x1xf32>
      %cst_23 = arith.constant 9.99999996E-13 : f32
      %42 = vector.broadcast %cst_23 : f32 to vector<16x1xf32>
      %43 = arith.addf %41, %42 : vector<16x1xf32>
      %44 = math.rsqrt %43 : vector<16x1xf32>
      %45 = vector.broadcast %44 : vector<16x1xf32> to vector<16x32xf32>
      %46 = arith.mulf %36, %45 : vector<16x32xf32>
      %c0_24 = arith.constant 0 : index
      %c0_25 = arith.constant 0 : index
      %47 = vector.load %arg5[%c0_24, %c0_25] : memref<1x32xf32, #tpu.memory_space<vmem>>, vector<1x32xf32>
      %48 = vector.broadcast %47 : vector<1x32xf32> to vector<16x32xf32>
      %49 = arith.mulf %46, %48 : vector<16x32xf32>
      %c0_26 = arith.constant 0 : index
      %c0_27 = arith.constant 0 : index
      %50 = vector.load %arg6[%c0_26, %c0_27] : memref<1x32xf32, #tpu.memory_space<vmem>>, vector<1x32xf32>
      %51 = vector.broadcast %50 : vector<1x32xf32> to vector<16x32xf32>
      %52 = arith.addf %49, %51 : vector<16x32xf32>
      %53 = arith.truncf %52 : vector<16x32xf32> to vector<16x32xbf16>
      %c0_28 = arith.constant 0 : index
      %c0_29 = arith.constant 0 : index
      %54 = vector.load %arg10[%c0_28, %c0_29] : memref<16x32xbf16, #tpu.memory_space<vmem>>, vector<16x32xbf16>
      tpu.vector_store %arg10[%c0_28, %c0_29], %53 {strides = array<i32>} : memref<16x32xbf16, #tpu.memory_space<vmem>>, vector<16x32xbf16>,
    } else {
    }
    %c0 = arith.constant 0 : index
    %c0_1 = arith.constant 0 : index
    %3 = vector.load %arg10[%c0, %c0_1] : memref<16x32xbf16, #tpu.memory_space<vmem>>, vector<16x32xbf16>
    %c0_2 = arith.constant 0 : index
    %c0_3 = arith.constant 0 : index
    %4 = vector.load %arg7[%c0_2, %c0_3] : memref<32x128xbf16, #tpu.memory_space<vmem>>, vector<32x128xbf16>
    %cst = arith.constant dense<0.000000e+00> : vector<16x128xf32>
    %5 = tpu.matmul %3, %4, %cst {dimension_numbers = #tpu.dot_dimension_numbers<[1], [0], [0], [1], [0, 0, 1, 1], [], []>} : vector<16x32xbf16>, vector<32x128xbf16>, vector<16x128xf32> -> vector<16x128xf32>
    %c0_4 = arith.constant 0 : index
    %c0_5 = arith.constant 0 : index
    %6 = vector.load %arg8[%c0_4, %c0_5] : memref<1x128xf32, #tpu.memory_space<vmem>>, vector<1x128xf32>
    %7 = vector.broadcast %6 : vector<1x128xf32> to vector<16x128xf32>
    %8 = arith.addf %5, %7 : vector<16x128xf32>
    %9 = arith.truncf %8 : vector<16x128xf32> to vector<16x128xbf16>
    %c0_6 = arith.constant 0 : index
    %c0_7 = arith.constant 0 : index
    %10 = vector.load %arg9[%c0_6, %c0_7] : memref<16x128xbf16, #tpu.memory_space<vmem>>, vector<16x128xbf16>
    tpu.vector_store %arg9[%c0_6, %c0_7], %9 {strides = array<i32>} : memref<16x128xbf16, #tpu.memory_space<vmem>>, vector<16x128xbf16>,
    return
  }
  func.func @transform_0(%arg0: i32, %arg1: i32) -> (i32, i32) {
    %c0_i32 = arith.constant 0 : i32
    %c0_i32_0 = arith.constant 0 : i32
    return %arg0, %c0_i32 : i32, i32
  }
  func.func @transform_1(%arg0: i32, %arg1: i32) -> (i32, i32) {
    %c0_i32 = arith.constant 0 : i32
    %c0_i32_0 = arith.constant 0 : i32
    %c0_i32_1 = arith.constant 0 : i32
    return %c0_i32, %c0_i32_0 : i32, i32
  }
  func.func @transform_2(%arg0: i32, %arg1: i32) -> (i32, i32) {
    %c0_i32 = arith.constant 0 : i32
    %c0_i32_0 = arith.constant 0 : i32
    %c0_i32_1 = arith.constant 0 : i32
    return %c0_i32, %c0_i32_0 : i32, i32
  }
  func.func @transform_3(%arg0: i32, %arg1: i32) -> (i32, i32) {
    %c0_i32 = arith.constant 0 : i32
    %c0_i32_0 = arith.constant 0 : i32
    %c0_i32_1 = arith.constant 0 : i32
    return %c0_i32, %c0_i32_0 : i32, i32
  }
  func.func @transform_4(%arg0: i32, %arg1: i32) -> (i32, i32) {
    %c0_i32 = arith.constant 0 : i32
    %c0_i32_0 = arith.constant 0 : i32
    %c0_i32_1 = arith.constant 0 : i32
    return %c0_i32, %c0_i32_0 : i32, i32
  }
  func.func @transform_5(%arg0: i32, %arg1: i32) -> (i32, i32) {
    %c0_i32 = arith.constant 0 : i32
    %c0_i32_0 = arith.constant 0 : i32
    return %c0_i32, %arg1 : i32, i32
  }
  func.func @transform_6(%arg0: i32, %arg1: i32) -> (i32, i32) {
    %c0_i32 = arith.constant 0 : i32
    %c0_i32_0 = arith.constant 0 : i32
    return %c0_i32, %arg1 : i32, i32
  }
  func.func @transform_7(%arg0: i32, %arg1: i32) -> (i32, i32) {
    %c0_i32 = arith.constant 0 : i32
    return %arg0, %arg1 : i32, i32
  }
}

</mosaic_0001>

<llo_original>
// kernel: tpu_custom_call.1
$region0: #{tpu_custom_call.1}
  #allocation0 [shape = 'u32[]', space=smem, size = 0x4, offset = 0x4, fixed_abs, tag = 'smem constant byte address 0x4 - core index']
  #allocation1 [shape = 'u32[144,128]{1,0:T(1,128)}', space=vmem, size = 0x12000, scoped, tag = 'internal scratch']
  #allocation2 [shape = 'bf16[16,32]{1,0:T(16,128)(2,1)}', space=vmem, size = 0x1000, scoped, tag = 'scratch operand']
  %s0 = inlined_call_operand.hbm [shape: f32[16,32], index: 0, kind: input, shape index: {}]
  %s1 = inlined_call_operand.hbm [shape: bf16[32,32], index: 1, kind: input, shape index: {}]
  %s2 = inlined_call_operand.vmem [shape: f32[1,32], index: 2, kind: input, shape index: {}]
  %s3 = inlined_call_operand.vmem [shape: f32[1,32], index: 3, kind: input, shape index: {}]
  %s4 = inlined_call_operand.vmem [shape: f32[1,32], index: 4, kind: input, shape index: {}]
  %s5 = inlined_call_operand.hbm [shape: bf16[32,256], index: 5, kind: input, shape index: {}]
  %s6 = inlined_call_operand.vmem [shape: f32[1,256], index: 6, kind: input, shape index: {}]
  %s7 = inlined_call_operand.hbm [shape: bf16[16,256], index: 7, kind: output, shape index: {}]
  %s8 = sld [smem:[#allocation0]]
  $region77: #{tpu_custom_call.1} parent=0
    _
  %s10 = ssub.s32 1, %s8
  %s11 = scalar_select 0, %s10, %s8
  $region1: #{tpu_custom_call.1} parent=0
    #allocation3 [shape = 'u8[8192]{0}', space=vmem, size = 0x2000, scoped, tag = 'input window, operand 0, single buffered']
    #allocation4 [shape = 's32[2]{0}', space=sflag, size = 0x8, scoped, tag = 'scoped memory for tpu_custom_call.1']
    #allocation5 [shape = 's32[2]{0}', space=sflag, size = 0x8, scoped, tag = 'scoped memory for tpu_custom_call.1']
    #allocation6 [shape = 'u8[8192]{0}', space=vmem, size = 0x2000, scoped, tag = 'input window, operand 1, single buffered']
    #allocation7 [shape = 's32[1]{0}', space=sflag, size = 0x4, scoped, tag = 'scoped memory for tpu_custom_call.1']
    #allocation8 [shape = 'u8[16384]{0}', space=vmem, size = 0x4000, scoped, tag = 'input window, operand 5']
    #allocation9 [shape = 'u8[8192]{0}', space=vmem, size = 0x2000, scoped, tag = 'output window, operand 0']
    %12 = vsyncpa [#allocation4], 0
    %13 = vsyncpa [#allocation7], 0
    %14 = vsyncpa [#allocation5], 0
    %s15 = scalar_lea.sflag [#allocation5], 1
    %16 = vsyncpa %s15, 0
    loop: start=0, step=1, limit=4
    $region2: #{tpu_custom_call.1} parent=1 // loop_pre_header
      _
    $region3: #{tpu_custom_call.1} parent=1 // loop_header
      %s18 = sphi 0, %s22
      %p19 = scmp.ge.s32.totalorder %s18, 4
      %s25 = sphi 0, %s37
      %s26 = sphi 0, %s33
      %s27 = sphi 0, %s25
      %s28 = sphi 0, %s26
      %s29 = sphi 0, %s27
      %s30 = sphi 0, %s28
      %s40 = sphi 0, %s42
      %s43 = sphi 0, %s40
      %s44 = sphi 0, %s43
      %s60 = sphi 0, %s44
      %s64 = sphi 0, %s64
      %s66 = sphi 0, %s64
      %s67 = sphi 0, %s66
      %s81 = sphi 0, %s67
      %s85 = sphi 0, %s85
      %s87 = sphi 0, %s85
      %s88 = sphi 0, %s87
      %s102 = sphi 0, %s88
      %s106 = sphi 0, %s106
      %s108 = sphi 0, %s106
      %s109 = sphi 0, %s108
      %s123 = sphi 0, %s109
      %s127 = sphi 0, %s127
      %s129 = sphi 0, %s127
      %s130 = sphi 0, %s129
      %s144 = sphi 0, %s130
      %s150 = sphi 0, %s152
      %s153 = sphi 0, %s150
      %s154 = sphi 0, %s153
      %s170 = sphi 0, %s154
      %s176 = sphi 0, %s178
      %s179 = sphi 0, %s176
      %s180 = sphi 0, %s179
      %s196 = sphi 0, %s180
      %s204 = sphi 0, %s206
      %s207 = sphi 0, %s204
      %s208 = sphi 0, %s207
      %s224 = sphi 0, %s208
    $region4: #{tpu_custom_call.1} parent=1 // loop_header_branch
      %21 = sbr.rel (%p19) target = $region8
    $region5: #{tpu_custom_call.1} parent=1 // loop_body
      %s23 = ssub.s32 %s18, 1
      %s24 = ssub.s32 %s18, 2
      %s31 = sadd.s32 1, %s26
      %p32 = scmp.ge.s32.totalorder %s31, 2
      %s33 = scalar_select %p32, 0, %s31
      %s34 = sadd.s32 1, %s25
      %s35 = scalar_select %p32, %s34, %s25
      %p36 = scmp.ge.s32.totalorder %s35, 1
      %s37 = scalar_select %p36, 0, %s35
      %s38 = ssub.s32 %s25, %s37
      %p39 = scmp.eq.s32.totalorder %s38, 0
      %s41 = sadd.s32 %s40, 1
      %s42 = scalar_select %p39, %s40, %s41
      %p45 = pneg %p39
      %p46 = scmp.eq.s32.totalorder %s18, 1
      %p47 = por %p45, %p46
      %p48 = scmp.ne.s32.totalorder %s40, %s43
      %p49 = scmp.eq.s32.totalorder %s18, 0
      %p50 = por %p48, %p49
      %p51 = scmp.ne.s32.totalorder %s40, %s43
      %p52 = scmp.eq.s32.totalorder %s23, 1
      %p53 = por %p51, %p52
      %p54 = scmp.ne.s32.totalorder %s43, %s44
      %p55 = scmp.eq.s32.totalorder %s23, 0
      %p56 = por %p54, %p55
      %p57 = scmp.ne.s32.totalorder %s43, %s44
      %p58 = scmp.eq.s32.totalorder %s24, 1
      %p59 = por %p57, %p58
      %p61 = scmp.ne.s32.totalorder %s44, %s60
      %p62 = scmp.eq.s32.totalorder %s24, 0
      %p63 = por %p61, %p62
      %s65 = sadd.s32 %s64, 1
      %p68 = scmp.eq.s32.totalorder %s18, 1
      %p69 = scmp.ne.s32.totalorder %s64, %s66
      %p70 = scmp.eq.s32.totalorder %s18, 0
      %p71 = por %p69, %p70
      %p72 = scmp.ne.s32.totalorder %s64, %s66
      %p73 = scmp.eq.s32.totalorder %s23, 1
      %p74 = por %p72, %p73
      %p75 = scmp.ne.s32.totalorder %s66, %s67
      %p76 = scmp.eq.s32.totalorder %s23, 0
      %p77 = por %p75, %p76
      %p78 = scmp.ne.s32.totalorder %s66, %s67
      %p79 = scmp.eq.s32.totalorder %s24, 1
      %p80 = por %p78, %p79
      %p82 = scmp.ne.s32.totalorder %s67, %s81
      %p83 = scmp.eq.s32.totalorder %s24, 0
      %p84 = por %p82, %p83
      %s86 = sadd.s32 %s85, 1
      %p89 = scmp.eq.s32.totalorder %s18, 1
      %p90 = scmp.ne.s32.totalorder %s85, %s87
      %p91 = scmp.eq.s32.totalorder %s18, 0
      %p92 = por %p90, %p91
      %p93 = scmp.ne.s32.totalorder %s85, %s87
      %p94 = scmp.eq.s32.totalorder %s23, 1
      %p95 = por %p93, %p94
      %p96 = scmp.ne.s32.totalorder %s87, %s88
      %p97 = scmp.eq.s32.totalorder %s23, 0
      %p98 = por %p96, %p97
      %p99 = scmp.ne.s32.totalorder %s87, %s88
      %p100 = scmp.eq.s32.totalorder %s24, 1
      %p101 = por %p99, %p100
      %p103 = scmp.ne.s32.totalorder %s88, %s102
      %p104 = scmp.eq.s32.totalorder %s24, 0
      %p105 = por %p103, %p104
      %s107 = sadd.s32 %s106, 1
      %p110 = scmp.eq.s32.totalorder %s18, 1
      %p111 = scmp.ne.s32.totalorder %s106, %s108
      %p112 = scmp.eq.s32.totalorder %s18, 0
      %p113 = por %p111, %p112
      %p114 = scmp.ne.s32.totalorder %s106, %s108
      %p115 = scmp.eq.s32.totalorder %s23, 1
      %p116 = por %p114, %p115
      %p117 = scmp.ne.s32.totalorder %s108, %s109
      %p118 = scmp.eq.s32.totalorder %s23, 0
      %p119 = por %p117, %p118
      %p120 = scmp.ne.s32.totalorder %s108, %s109
      %p121 = scmp.eq.s32.totalorder %s24, 1
      %p122 = por %p120, %p121
      %p124 = scmp.ne.s32.totalorder %s109, %s123
      %p125 = scmp.eq.s32.totalorder %s24, 0
      %p126 = por %p124, %p125
      %s128 = sadd.s32 %s127, 1
      %p131 = scmp.eq.s32.totalorder %s18, 1
      %p132 = scmp.ne.s32.totalorder %s127, %s129
      %p133 = scmp.eq.s32.totalorder %s18, 0
      %p134 = por %p132, %p133
      %p135 = scmp.ne.s32.totalorder %s127, %s129
      %p136 = scmp.eq.s32.totalorder %s23, 1
      %p137 = por %p135, %p136
      %p138 = scmp.ne.s32.totalorder %s129, %s130
      %p139 = scmp.eq.s32.totalorder %s23, 0
      %p140 = por %p138, %p139
      %p141 = scmp.ne.s32.totalorder %s129, %s130
      %p142 = scmp.eq.s32.totalorder %s24, 1
      %p143 = por %p141, %p142
      %p145 = scmp.ne.s32.totalorder %s130, %s144
      %p146 = scmp.eq.s32.totalorder %s24, 0
      %p147 = por %p145, %p146
      %s148 = ssub.s32 %s26, %s33
      %p149 = scmp.eq.s32.totalorder %s148, 0
      %s151 = sadd.s32 %s150, 1
      %s152 = scalar_select %p149, %s150, %s151
      %p155 = pneg %p149
      %p156 = scmp.eq.s32.totalorder %s18, 1
      %p157 = por %p155, %p156
      %p158 = scmp.ne.s32.totalorder %s150, %s153
      %p159 = scmp.eq.s32.totalorder %s18, 0
      %p160 = por %p158, %p159
      %p161 = scmp.ne.s32.totalorder %s150, %s153
      %p162 = scmp.eq.s32.totalorder %s23, 1
      %p163 = por %p161, %p162
      %p164 = scmp.ne.s32.totalorder %s153, %s154
      %p165 = scmp.eq.s32.totalorder %s23, 0
      %p166 = por %p164, %p165
      %p167 = scmp.ne.s32.totalorder %s153, %s154
      %p168 = scmp.eq.s32.totalorder %s24, 1
      %p169 = por %p167, %p168
      %p171 = scmp.ne.s32.totalorder %s154, %s170
      %p172 = scmp.eq.s32.totalorder %s24, 0
      %p173 = por %p171, %p172
      %s174 = ssub.s32 %s26, %s33
      %p175 = scmp.eq.s32.totalorder %s174, 0
      %s177 = sadd.s32 %s176, 1
      %s178 = scalar_select %p175, %s176, %s177
      %p181 = pneg %p175
      %p182 = scmp.eq.s32.totalorder %s18, 1
      %p183 = por %p181, %p182
      %p184 = scmp.ne.s32.totalorder %s176, %s179
      %p185 = scmp.eq.s32.totalorder %s18, 0
      %p186 = por %p184, %p185
      %p187 = scmp.ne.s32.totalorder %s176, %s179
      %p188 = scmp.eq.s32.totalorder %s23, 1
      %p189 = por %p187, %p188
      %p190 = scmp.ne.s32.totalorder %s179, %s180
      %p191 = scmp.eq.s32.totalorder %s23, 0
      %p192 = por %p190, %p191
      %p193 = scmp.ne.s32.totalorder %s179, %s180
      %p194 = scmp.eq.s32.totalorder %s24, 1
      %p195 = por %p193, %p194
      %p197 = scmp.ne.s32.totalorder %s180, %s196
      %p198 = scmp.eq.s32.totalorder %s24, 0
      %p199 = por %p197, %p198
      %s200 = ssub.s32 %s25, %s37
      %s201 = ssub.s32 %s26, %s33
      %s202 = sor.u32 %s200, %s201
      %p203 = scmp.eq.s32.totalorder %s202, 0
      %s205 = sadd.s32 %s204, 1
      %s206 = scalar_select %p203, %s204, %s205
      %p209 = pneg %p203
      %p210 = scmp.eq.s32.totalorder %s18, 1
      %p211 = por %p209, %p210
      %p212 = scmp.ne.s32.totalorder %s204, %s207
      %p213 = scmp.eq.s32.totalorder %s18, 0
      %p214 = por %p212, %p213
      %p215 = scmp.ne.s32.totalorder %s204, %s207
      %p216 = scmp.eq.s32.totalorder %s23, 1
      %p217 = por %p215, %p216
      %p218 = scmp.ne.s32.totalorder %s207, %s208
      %p219 = scmp.eq.s32.totalorder %s23, 0
      %p220 = por %p218, %p219
      %p221 = scmp.ne.s32.totalorder %s207, %s208
      %p222 = scmp.eq.s32.totalorder %s24, 1
      %p223 = por %p221, %p222
      %p225 = scmp.ne.s32.totalorder %s208, %s224
      %p226 = scmp.eq.s32.totalorder %s24, 0
      %p227 = por %p225, %p226
      %p228 = scmp.le.s32.totalorder 1, %s18
      %p229 = scmp.lt.s32.totalorder %s18, 3
      %p230 = pnand %p228, %p229
      %p231 = pneg %p230
      // Predicated region
      $region9: #{tpu_custom_call.1} parent=5 // pred_check
        _
      $region10: #{tpu_custom_call.1} parent=5 // pred_check_branch
        %233 = sbr.rel (%p230) target = $region12
      $region11: #{tpu_custom_call.1} parent=5 // pred_region
        %s234 = ssub.s32 %s18, 1
        // Predicated region
        $region13: #{tpu_custom_call.1} parent=11 // pred_check
          %p235 = pneg %p56
        $region14: #{tpu_custom_call.1} parent=11 // pred_check_branch
          %237 = sbr.rel (%p235) target = $region16
        $region15: #{tpu_custom_call.1} parent=11 // pred_region
          %s238 = smul.u32 2, %s27
          %s240 = ssub.s32 256, 256
          %241 = vsyncadd [#allocation4], %s240
          %s242 = smul.addr %s238, 128
          %s243 = scalar_lea.hbm %s0, %s242
          %s244 = sshll.u32 [#allocation3], 4
          %s245 = int_to_ptr.vmem [resolvable:$true] %s244
          %250 = dma.hbm_to_vmem [thread:$0]  %s243, 256, %s245, [#allocation4], 128, 128, 8
        $region16: #{tpu_custom_call.1} parent=11 // pred_fallthru
          _
        // Predicated region
        $region17: #{tpu_custom_call.1} parent=11 // pred_check
          %p251 = pneg %p77
        $region18: #{tpu_custom_call.1} parent=11 // pred_check_branch
          %253 = sbr.rel (%p251) target = $region20
        $region19: #{tpu_custom_call.1} parent=11 // pred_region
          %s255 = ssub.s32 256, 256
          %256 = vsyncadd [#allocation7], %s255
          %s257 = sshll.u32 [#allocation6], 4
          %s258 = int_to_ptr.vmem [resolvable:$true] %s257
          %263 = dma.hbm_to_vmem [thread:$0]  %s1, 256, %s258, [#allocation7], 64, 64, 4
        $region20: #{tpu_custom_call.1} parent=11 // pred_fallthru
          _
        // Predicated region
        $region21: #{tpu_custom_call.1} parent=11 // pred_check
          %p264 = pneg %p98
        $region22: #{tpu_custom_call.1} parent=11 // pred_check_branch
          %266 = sbr.rel (%p264) target = $region24
        $region23: #{tpu_custom_call.1} parent=11 // pred_region
          _
        $region24: #{tpu_custom_call.1} parent=11 // pred_fallthru
          _
        // Predicated region
        $region25: #{tpu_custom_call.1} parent=11 // pred_check
          %p267 = pneg %p119
        $region26: #{tpu_custom_call.1} parent=11 // pred_check_branch
          %269 = sbr.rel (%p267) target = $region28
        $region27: #{tpu_custom_call.1} parent=11 // pred_region
          _
        $region28: #{tpu_custom_call.1} parent=11 // pred_fallthru
          _
        // Predicated region
        $region29: #{tpu_custom_call.1} parent=11 // pred_check
          %p270 = pneg %p140
        $region30: #{tpu_custom_call.1} parent=11 // pred_check_branch
          %272 = sbr.rel (%p270) target = $region32
        $region31: #{tpu_custom_call.1} parent=11 // pred_region
          _
        $region32: #{tpu_custom_call.1} parent=11 // pred_fallthru
          _
      $region12: #{tpu_custom_call.1} parent=5 // pred_fallthru
        _
      %p273 = scmp.lt.s32.totalorder %s18, 2
      // Predicated region
      $region33: #{tpu_custom_call.1} parent=5 // pred_check
        %p274 = pneg %p273
      $region34: #{tpu_custom_call.1} parent=5 // pred_check_branch
        %276 = sbr.rel (%p274) target = $region36
      $region35: #{tpu_custom_call.1} parent=5 // pred_region
        // Predicated region
        $region37: #{tpu_custom_call.1} parent=35 // pred_check
          %p277 = pneg %p160
        $region38: #{tpu_custom_call.1} parent=35 // pred_check_branch
          %279 = sbr.rel (%p277) target = $region40
        $region39: #{tpu_custom_call.1} parent=35 // pred_region
          %s280 = sand.u32 %s18, 1
          %s281 = scalar_lea.sflag [#allocation4], %s280
          %s282 = sand.u32 %s150, 1
          %s283 = smul.addr %s282, 16
          %s284 = scalar_lea.vmem [#allocation8], %s283
          %s286 = ssub.s32 256, 256
          %287 = vsyncadd %s281, %s286
          %s288 = smul.addr %s26, 64
          %s289 = scalar_lea.hbm %s5, %s288
          %s290 = sshll.u32 %s284, 4
          %s291 = int_to_ptr.vmem [resolvable:$true] %s290
          %296 = dma.hbm_to_vmem [thread:$0]  %s289, 256, %s291, %s281, 128, 64, 4
        $region40: #{tpu_custom_call.1} parent=35 // pred_fallthru
          _
        // Predicated region
        $region41: #{tpu_custom_call.1} parent=35 // pred_check
          %p297 = pneg %p186
        $region42: #{tpu_custom_call.1} parent=35 // pred_check_branch
          %299 = sbr.rel (%p297) target = $region44
        $region43: #{tpu_custom_call.1} parent=35 // pred_region
          %p300 = scmp.lt.s32.totalorder %s26, 1
          %s301 = scalar_select %p300, %s26, 1
          %s302 = scalar_lea.vmem %s6, %s301
        $region44: #{tpu_custom_call.1} parent=35 // pred_fallthru
          _
      $region36: #{tpu_custom_call.1} parent=5 // pred_fallthru
        _
      %p303 = scmp.le.s32.totalorder 1, %s18
      %p304 = scmp.lt.s32.totalorder %s18, 3
      %p305 = pnand %p303, %p304
      %p306 = pneg %p305
      // Predicated region
      $region45: #{tpu_custom_call.1} parent=5 // pred_check
        _
      $region46: #{tpu_custom_call.1} parent=5 // pred_check_branch
        %308 = sbr.rel (%p305) target = $region48
      $region47: #{tpu_custom_call.1} parent=5 // pred_region
        %s309 = ssub.s32 %s18, 1
        // Predicated region
        $region49: #{tpu_custom_call.1} parent=47 // pred_check
          %p310 = pneg %p56
        $region50: #{tpu_custom_call.1} parent=47 // pred_check_branch
          %312 = sbr.rel (%p310) target = $region52
        $region51: #{tpu_custom_call.1} parent=47 // pred_region
          %313 = dma.done [#allocation4], 256
        $region52: #{tpu_custom_call.1} parent=47 // pred_fallthru
          _
        // Predicated region
        $region53: #{tpu_custom_call.1} parent=47 // pred_check
          %p314 = pneg %p77
        $region54: #{tpu_custom_call.1} parent=47 // pred_check_branch
          %316 = sbr.rel (%p314) target = $region56
        $region55: #{tpu_custom_call.1} parent=47 // pred_region
          %317 = dma.done [#allocation7], 256
        $region56: #{tpu_custom_call.1} parent=47 // pred_fallthru
          _
        %s318 = sand.u32 %s23, 1
        %s319 = scalar_lea.sflag [#allocation4], %s318
        %s320 = sand.u32 %s153, 1
        %s321 = smul.addr %s320, 16
        %s322 = scalar_lea.vmem [#allocation8], %s321
        // Predicated region
        $region57: #{tpu_custom_call.1} parent=47 // pred_check
          %p323 = pneg %p166
        $region58: #{tpu_custom_call.1} parent=47 // pred_check_branch
          %325 = sbr.rel (%p323) target = $region60
        $region59: #{tpu_custom_call.1} parent=47 // pred_region
          %326 = dma.done %s319, 256
        $region60: #{tpu_custom_call.1} parent=47 // pred_fallthru
          _
        %p327 = pneg %p56
        %p328 = pneg %p53
        %p329 = pneg %p77
        %p330 = pneg %p74
        %p331 = pneg %p98
        %p332 = pneg %p95
        %p333 = pneg %p119
        %p334 = pneg %p116
        %p335 = pneg %p140
        %p336 = pneg %p137
        %s337 = sand.u32 %s23, 1
        %s338 = scalar_lea.sflag [#allocation4], %s337
        %s339 = sand.u32 %s153, 1
        %s340 = smul.addr %s339, 16
        %s341 = scalar_lea.vmem [#allocation8], %s340
        %p342 = pneg %p166
        %p343 = pneg %p163
        %p344 = scmp.lt.s32.totalorder %s28, 1
        %s345 = scalar_select %p344, %s28, 1
        %s346 = scalar_lea.vmem %s6, %s345
        %p347 = pneg %p192
        %p348 = pneg %p189
        %p349 = pneg %p220
        %p350 = pneg %p217
        %s351 = sand.u32 %s207, 1
        %s352 = scalar_lea.sflag [#allocation5], %s351
        %s353 = sand.u32 %s207, 1
        %s354 = smul.addr %s353, 8
        %s355 = scalar_lea.vmem [#allocation9], %s354
        %s356 = smul.u32 2, %s27
        %p357 = scmp.lt.s32.totalorder %s28, 1
        %s358 = scalar_select %p357, %s28, 1
        %s359 = scalar_lea.vmem %s6, %s358
        %s360 = smul.u32 2, %s27
        %p362 = scmp.eq.s32.totalorder %s28, 0
        // Predicated region
        $region61: #{tpu_custom_call.1} parent=47 // pred_check
          %p363 = pneg %p362
        $region62: #{tpu_custom_call.1} parent=47 // pred_check_branch
          %365 = sbr.rel (%p363) target = $region64
        $region63: #{tpu_custom_call.1} parent=47 // pred_region
          %v366 = vld [vmem:[#allocation3] sm:$0xff]
          %v367 = vld [vmem:[#allocation3 + $0x8] sm:$0xff]
          %v368 = vpack.c.bf16 %v367, %v366
          %v369 = vld [vmem:[#allocation6] sm:$0xf]
          %v370 = vld [vmem:[#allocation6 + $0x4] sm:$0xf]
          %v371 = vld [vmem:[#allocation6 + $0x8] sm:$0xf]
          %v372 = vld [vmem:[#allocation6 + $0xc] sm:$0xf]
          %v373 = vld [vmem:[%s2] sm:$0x1]
          %v375 = vlaneseq
          %v376 = vshrl.u32 %v375, 7
          %v377 = vsub.s32 0, %v376
          %v378 = vrot.slane %v373, %v377
          %v384 = vunpack.c.l.b16 %v369
          %v385 = vunpack.c.l.b16 %v370
          %v386 = vunpack.c.l.b16 %v371
          %v387 = vunpack.c.l.b16 %v372
          %v388 = vpack.c.b16 %v385, %v384
          %v389 = vpack.c.b16 %v387, %v386
          %vm392 = vcmask 261120
          %v394 = vsel %vm392, %v368, 0
          %396 = vmatprep.subr.bf16.mxu0 0
          %397 = vmatpush1.bf16.msra.mxu0 %v388
          %398 = vmatprep.subr.bf16.mxu0 0
          %399 = vmatpush1.bf16.msra.mxu0 %v389
          %400 = vmatprep.subr.bf16.mxu0 0
          %401 = vmatpush1.bf16.msra.mxu0 0
          %402 = vmatprep.subr.bf16.mxu0 0
          %403 = vmatpush1.bf16.msra.mxu0 0
          %404 = vmatprep.subr.bf16.mxu0 0
          %405 = vmatpush1.bf16.msra.mxu0 0
          %406 = vmatprep.subr.bf16.mxu0 0
          %407 = vmatpush1.bf16.msra.mxu0 0
          %408 = vmatprep.subr.bf16.mxu0 0
          %409 = vmatpush1.bf16.msra.mxu0 0
          %410 = vmatprep.subr.bf16.mxu0 0
          %411 = vmatpush1.bf16.msra.mxu0 0
          %412 = vmatprep.subr.bf16.mxu0 0
          %413 = vmatpush1.bf16.msra.mxu0 0
          %414 = vmatprep.subr.bf16.mxu0 0
          %415 = vmatpush1.bf16.msra.mxu0 0
          %416 = vmatprep.subr.bf16.mxu0 0
          %417 = vmatpush1.bf16.msra.mxu0 0
          %418 = vmatprep.subr.bf16.mxu0 0
          %419 = vmatpush1.bf16.msra.mxu0 0
          %420 = vmatprep.subr.bf16.mxu0 0
          %421 = vmatpush1.bf16.msra.mxu0 0
          %422 = vmatprep.subr.bf16.mxu0 0
          %423 = vmatpush1.bf16.msra.mxu0 0
          %424 = vmatprep.subr.bf16.mxu0 0
          %425 = vmatpush1.bf16.msra.mxu0 0
          %426 = vmatprep.subr.bf16.mxu0 0
          %427 = vmatpush1.bf16.msra.mxu0 0
          %428 = vmatprep.mubr.bf16.mxu0 0
          %429 = vmatmul.mubr.bf16.gmra.mrb[0].mxu0 %v394
          %v430 = vpop.f32.mrb[0].mxu0
          %v431 = vadd.f32 %v378, %v430
          %v432 = vpop.f32.mrb[0].mxu0
          %v433 = vpop.f32.mrb[0].mxu0
          %v434 = vadd.f32 %v378, %v433
          %v435 = vpop.f32.mrb[0].mxu0
          %436 = vdwg.mxu0
          %v437 = vmul.f32 %v431, %v431
          %v438 = vmul.f32 %v434, %v434
          %v439 = vmul.f32 %v431, %v437
          %v440 = vmul.f32 %v434, %v438
          %v441 = vmul.f32 %v439, 0.044715
          %v442 = vmul.f32 %v440, 0.044715
          %v443 = vadd.f32 %v431, %v441
          %v444 = vadd.f32 %v434, %v442
          %v445 = vmul.f32 %v443, 0.7978846
          %v446 = vmul.f32 %v444, 0.7978846
          %v447 = vtanh.pop %v445
          %v448 = vtanh.pop %v446
          %v449 = vadd.f32 %v447, 1.0
          %v450 = vadd.f32 %v448, 1.0
          %v451 = vmul.f32 %v449, 0.5
          %v452 = vmul.f32 %v450, 0.5
          %v453 = vmul.f32 %v431, %v451
          %v454 = vmul.f32 %v434, %v452
          %v455 = vsel %vm392, %v453, 0.0
          %456 = vadd.xlane.f32.xlu0 %v455
          %v457 = vpop.xlane.xlu0 %456
          %v458 = vsel %vm392, %v454, 0.0
          %459 = vadd.xlane.f32.xlu0 %v458
          %v460 = vpop.xlane.xlu0 %459
          %v461 = vrcp.pop 32.0
          %v462 = vmul.f32 %v457, %v461
          %v463 = vmul.f32 %v460, %v461
          %v464 = vsub.f32 %v453, %v462
          %v465 = vsub.f32 %v454, %v463
          %v466 = vmul.f32 %v464, %v464
          %v467 = vmul.f32 %v465, %v465
          %v468 = vsel %vm392, %v466, 0.0
          %469 = vadd.xlane.f32.xlu0 %v468
          %v470 = vpop.xlane.xlu0 %469
          %v471 = vsel %vm392, %v467, 0.0
          %472 = vadd.xlane.f32.xlu0 %v471
          %v473 = vpop.xlane.xlu0 %472
          %v474 = vmul.f32 %v470, %v461
          %v475 = vmul.f32 %v473, %v461
          %v476 = vadd.f32 %v474, 1e-12
          %v477 = vadd.f32 %v475, 1e-12
          %v478 = vrsqrt.pop %v476
          %v479 = vrsqrt.pop %v477
          %v480 = vmul.f32 %v464, %v478
          %v481 = vmul.f32 %v465, %v479
          %v482 = vld [vmem:[%s3] sm:$0x1]
          %v484 = vlaneseq
          %v485 = vshrl.u32 %v484, 7
          %v486 = vsub.s32 0, %v485
          %v487 = vrot.slane %v482, %v486
          %v489 = vmul.f32 %v480, %v487
          %v490 = vmul.f32 %v481, %v487
          %v491 = vld [vmem:[%s4] sm:$0x1]
          %v493 = vlaneseq
          %v494 = vshrl.u32 %v493, 7
          %v495 = vsub.s32 0, %v494
          %v496 = vrot.slane %v491, %v495
          %v498 = vadd.f32 %v489, %v496
          %v499 = vadd.f32 %v490, %v496
          %v500 = vpack.c.bf16 %v499, %v498
          %501 = vst.msk [vmem:[#allocation2] sm:$0xff] %vm392, %v500
        $region64: #{tpu_custom_call.1} parent=47 // pred_fallthru
          _
        %v502 = vld [vmem:[#allocation2] sm:$0xff]
        %v503 = vld [vmem:[%s322] sm:$0xf]
        %v504 = vld [vmem:[%s322 + $0x4] sm:$0xf]
        %v505 = vld [vmem:[%s322 + $0x8] sm:$0xf]
        %v506 = vld [vmem:[%s322 + $0xc] sm:$0xf]
        %v507 = vld [vmem:[%s359] sm:$0x1]
        %v509 = vlaneseq
        %v510 = vshrl.u32 %v509, 7
        %v511 = vsub.s32 0, %v510
        %v512 = vrot.slane %v507, %v511
        %v518 = vunpack.c.l.b16 %v503
        %v519 = vunpack.c.l.b16 %v504
        %v520 = vunpack.c.l.b16 %v505
        %v521 = vunpack.c.l.b16 %v506
        %v522 = vpack.c.b16 %v519, %v518
        %v523 = vpack.c.b16 %v521, %v520
        %vm526 = vcmask 261120
        %v528 = vsel %vm526, %v502, 0
        %530 = vmatprep.subr.bf16.mxu0 0
        %531 = vmatpush1.bf16.msra.mxu0 %v522
        %532 = vmatprep.subr.bf16.mxu0 0
        %533 = vmatpush1.bf16.msra.mxu0 %v523
        %534 = vmatprep.subr.bf16.mxu0 0
        %535 = vmatpush1.bf16.msra.mxu0 0
        %536 = vmatprep.subr.bf16.mxu0 0
        %537 = vmatpush1.bf16.msra.mxu0 0
        %538 = vmatprep.subr.bf16.mxu0 0
        %539 = vmatpush1.bf16.msra.mxu0 0
        %540 = vmatprep.subr.bf16.mxu0 0
        %541 = vmatpush1.bf16.msra.mxu0 0
        %542 = vmatprep.subr.bf16.mxu0 0
        %543 = vmatpush1.bf16.msra.mxu0 0
        %544 = vmatprep.subr.bf16.mxu0 0
        %545 = vmatpush1.bf16.msra.mxu0 0
        %546 = vmatprep.subr.bf16.mxu0 0
        %547 = vmatpush1.bf16.msra.mxu0 0
        %548 = vmatprep.subr.bf16.mxu0 0
        %549 = vmatpush1.bf16.msra.mxu0 0
        %550 = vmatprep.subr.bf16.mxu0 0
        %551 = vmatpush1.bf16.msra.mxu0 0
        %552 = vmatprep.subr.bf16.mxu0 0
        %553 = vmatpush1.bf16.msra.mxu0 0
        %554 = vmatprep.subr.bf16.mxu0 0
        %555 = vmatpush1.bf16.msra.mxu0 0
        %556 = vmatprep.subr.bf16.mxu0 0
        %557 = vmatpush1.bf16.msra.mxu0 0
        %558 = vmatprep.subr.bf16.mxu0 0
        %559 = vmatpush1.bf16.msra.mxu0 0
        %560 = vmatprep.subr.bf16.mxu0 0
        %561 = vmatpush1.bf16.msra.mxu0 0
        %562 = vmatprep.mubr.bf16.mxu0 0
        %563 = vmatmul.mubr.bf16.gmra.mrb[0].mxu0 %v528
        %v564 = vpop.f32.mrb[0].mxu0
        %v565 = vadd.f32 %v512, %v564
        %v566 = vpop.f32.mrb[0].mxu0
        %v567 = vpop.f32.mrb[0].mxu0
        %v568 = vadd.f32 %v512, %v567
        %v569 = vpop.f32.mrb[0].mxu0
        %570 = vdwg.mxu0
        %v571 = vpack.c.bf16 %v568, %v565
        %v573 = vunpack.c.l.b16 %v571
        %v574 = vunpack.c.h.b16 %v571
        %v575 = vpack.c.b16 %v573, %v573
        %v576 = vpack.c.b16 %v574, %v574
        %579 = vst [vmem:[%s355] sm:$0xf] %v575
        %580 = vst [vmem:[%s355 + $0x4] sm:$0xf] %v576
        %s581 = sand.u32 %s207, 1
        %s582 = scalar_lea.sflag [#allocation5], %s581
        %s583 = sand.u32 %s207, 1
        %s584 = smul.addr %s583, 8
        %s585 = scalar_lea.vmem [#allocation9], %s584
        // Predicated region
        $region65: #{tpu_custom_call.1} parent=47 // pred_check
          %p586 = pneg %p217
        $region66: #{tpu_custom_call.1} parent=47 // pred_check_branch
          %588 = sbr.rel (%p586) target = $region68
        $region67: #{tpu_custom_call.1} parent=47 // pred_region
          %s589 = smul.u32 2, %s27
          %s591 = ssub.s32 128, 128
          %592 = vsyncadd %s582, %s591
          %s593 = smul.addr %s589, 2
          %s594 = sadd.s32 %s28, %s593
          %s595 = smul.addr %s594, 64
          %s596 = scalar_lea.hbm %s7, %s595
          %s597 = sshll.u32 %s585, 4
          %s598 = int_to_ptr.vmem [resolvable:$true] %s597
          %603 = dma.vmem_to_hbm [thread:$0]  %s598, 128, %s596, %s582, 64, 128, 4
        $region68: #{tpu_custom_call.1} parent=47 // pred_fallthru
          _
      $region48: #{tpu_custom_call.1} parent=5 // pred_fallthru
        _
      %p604 = scmp.le.s32.totalorder 2, %s18
      // Predicated region
      $region69: #{tpu_custom_call.1} parent=5 // pred_check
        %p605 = pneg %p604
      $region70: #{tpu_custom_call.1} parent=5 // pred_check_branch
        %607 = sbr.rel (%p605) target = $region72
      $region71: #{tpu_custom_call.1} parent=5 // pred_region
        %s608 = ssub.s32 %s18, 2
        // Predicated region
        $region73: #{tpu_custom_call.1} parent=71 // pred_check
          %p609 = pneg %p223
        $region74: #{tpu_custom_call.1} parent=71 // pred_check_branch
          %611 = sbr.rel (%p609) target = $region76
        $region75: #{tpu_custom_call.1} parent=71 // pred_region
          %s612 = sand.u32 %s208, 1
          %s613 = scalar_lea.sflag [#allocation5], %s612
          %s614 = sand.u32 %s208, 1
          %s615 = smul.addr %s614, 8
          %s616 = scalar_lea.vmem [#allocation9], %s615
          %617 = dma.done %s613, 128
        $region76: #{tpu_custom_call.1} parent=71 // pred_fallthru
          _
      $region72: #{tpu_custom_call.1} parent=5 // pred_fallthru
        _
    $region6: #{tpu_custom_call.1} parent=1 // loop_footer
      %s22 = sadd.s32 1, %s18
    $region7: #{tpu_custom_call.1} parent=1 // loop_footer_branch
      %17 = sbr.rel target = $region3
    $region8: #{tpu_custom_call.1} parent=1 // loop_exit
      _
    %618 = vsyncpa [#allocation4], 1
    %s619 = scalar_lea.sflag [#allocation4], 1
    %620 = vsyncpa %s619, 1
    %621 = vsyncpa [#allocation7], 1
    %622 = vsyncpa [#allocation5], 1
    %s623 = scalar_lea.sflag [#allocation5], 1
    %624 = vsyncpa %s623, 1

</llo_original>
